<compile_context>
chip_gen: v7x
topology: tpu7x:2x2x1
jax: 0.10.0
libtpu: 0.0.40
codegen_flags: <defaults>
</compile_context>

<pallas_src>
import functools

import jax
import jax.numpy as jnp
from jax.experimental import pallas as pl
from jax.experimental.pallas import tpu as pltpu


_STRIP_F32_BYTES = 512 * 1024        # live f32 sub-block size for strip-mining


def _cdiv(a, b):
    return -(-a // b)


def _round_up(x, m):
    return (x + m - 1) // m * m


def _vmem_budgets():
    """Per-generation VMEM limit and per-tile byte budget."""
    try:
        cap = int(pltpu.get_tpu_info().vmem_capacity_bytes)
        if cap <= 0:
            raise ValueError
    except Exception:
        cap = 64 * 1024 * 1024                      # conservative: v7x physical
    vmem_limit = (cap * 3) // 4                     # 48 MiB v7x, 96 MiB v5e/v6e
    tile_budget = max(2 * 1024 * 1024,
                      min(8 * 1024 * 1024, vmem_limit // 8))
    return vmem_limit, tile_budget


# ---------------------------------------------------------------------------
# Kernels
# ---------------------------------------------------------------------------

def _grn_fused_kernel(gamma_ref, beta_ref, x_ref, o_ref, *, eps, c_true, sub):
    """Single-pass GRN: full (Bt, C, HW) tile resident in VMEM."""
    bt, c, hw = x_ref.shape
    # Strip-mined sum-of-squares in f32: only one `sub`-wide upcast is live at
    # a time (static 128-aligned slices == fully-unrolled loop).
    ss = jnp.zeros((bt, c, 1), jnp.float32)
    for start in range(0, hw, sub):
        stop = min(start + sub, hw)
        xs = x_ref[:, :, start:stop].astype(jnp.float32)
        ss = ss + jnp.sum(xs * xs, axis=-1, keepdims=True)
    gx = jnp.sqrt(ss)                                            # (Bt, C, 1)
    # Mean over channels; approx reciprocal runs on the otherwise-idle EUP.
    denom = jnp.sum(gx, axis=1, keepdims=True) * (1.0 / c_true) + eps
    nx = gx * pl.reciprocal(denom, approx=True)                  # (Bt, C, 1)
    # Fused per-channel scale: y = x * (gamma*nx + 1) + beta, in native dtype.
    s = (gamma_ref[...].astype(jnp.float32) * nx + 1.0).astype(x_ref.dtype)
    o_ref[...] = x_ref[...] * s + beta_ref[...].astype(x_ref.dtype)


def _grn_sumsq_kernel(x_ref, ss_ref, *, hw_true, chunk, ragged):
    """Pass 1: accumulate sum(x^2) over HW chunks into (Bt, C, 1) f32."""
    j = pl.program_id(1)

    @pl.when(j == 0)
    def _():
        ss_ref[...] = jnp.zeros_like(ss_ref)

    x32 = x_ref[...].astype(jnp.float32)                         # (Bt, C, chunk)
    if ragged:
        # Last chunk overruns HW: out-of-bounds lanes are not guaranteed zero,
        # so mask them before squaring.
        lane = jax.lax.broadcasted_iota(jnp.int32, x32.shape, dimension=2)
        x32 = jnp.where(j * chunk + lane < hw_true, x32, 0.0)
    ss_ref[...] += jnp.sum(x32 * x32, axis=-1, keepdims=True)    # (Bt, C, 1)


def _grn_apply_kernel(ss_ref, gamma_ref, beta_ref, x_ref, o_ref, *, eps, c_true):
    """Pass 2: per HW chunk, y = x * (gamma*nx + 1) + beta.

    No masking needed: out-of-bounds lanes in the last chunk only produce
    garbage in lanes whose writes Pallas drops.
    """
    gx = jnp.sqrt(ss_ref[...])                                   # (Bt, C, 1) f32
    denom = jnp.sum(gx, axis=1, keepdims=True) * (1.0 / c_true) + eps
    nx = gx * pl.reciprocal(denom, approx=True)                  # (Bt, C, 1)
    s = (gamma_ref[...].astype(jnp.float32) * nx + 1.0).astype(x_ref.dtype)
    o_ref[...] = x_ref[...] * s + beta_ref[...].astype(x_ref.dtype)


# ---------------------------------------------------------------------------
# Wrapper
# ---------------------------------------------------------------------------

def grn_forward(x_nchw, gamma, beta, eps=1e-6, hw_chunk=None, fused_sub=None):
    """x_nchw: (N, C, H, W); gamma/beta: (1, C, 1, 1). Returns (N, C, H, W)."""
    N, C, H, W = x_nchw.shape
    HW = H * W
    dtype = x_nchw.dtype
    itemsize = jnp.dtype(dtype).itemsize
    vmem_limit, tile_budget = _vmem_budgets()

    x3 = x_nchw.reshape(N, C, HW)       # no padding: full-dim C / ragged HW
    g3 = gamma.reshape(1, C, 1)
    b3 = beta.reshape(1, C, 1)

    per_elem_bytes = C * HW * itemsize
    use_fused = (hw_chunk is None) and (per_elem_bytes <= tile_budget)

    if use_fused:
        # ---------------- fused single-pass path (2 HBM passes) ----------------
        bt_cap = max(1, tile_budget // per_elem_bytes)
        Bt = min(N, bt_cap)
        if N >= 2:
            Bt = min(Bt, _cdiv(N, 2))   # >= 2 grid steps -> both v7x TCs busy
        num_nb = _cdiv(N, Bt)

        if fused_sub is not None:
            sub = max(128, (fused_sub // 128) * 128)
        else:
            sub = max(128, (_STRIP_F32_BYTES // (Bt * C * 4)) // 128 * 128)

        kernel = functools.partial(_grn_fused_kernel, eps=eps,
                                   c_true=float(C), sub=sub)
        out3 = pl.pallas_call(
            kernel,
            out_shape=jax.ShapeDtypeStruct((N, C, HW), dtype),
            grid_spec=pltpu.PrefetchScalarGridSpec(
                num_scalar_prefetch=0,
                grid=(num_nb,),
                in_specs=[
                    pl.BlockSpec((1, C, 1), lambda i: (0, 0, 0)),
                    pl.BlockSpec((1, C, 1), lambda i: (0, 0, 0)),
                    pl.BlockSpec((Bt, C, HW), lambda i: (i, 0, 0)),
                ],
                out_specs=pl.BlockSpec((Bt, C, HW), lambda i: (i, 0, 0)),
            ),
            compiler_params=pltpu.CompilerParams(
                dimension_semantics=("parallel",),
                vmem_limit_bytes=vmem_limit,
            ),
        )(g3, b3, x3)
    else:
        # ---------------- two-pass path (HW-chunked, 3 HBM passes) -------------
        if hw_chunk is not None:
            assert hw_chunk % 128 == 0, "hw_chunk must be a multiple of 128"
            chunk = hw_chunk
        else:
            chunk = max(128, (tile_budget // (C * itemsize)) // 128 * 128)
        chunk = min(chunk, _round_up(HW, 128))
        num_chunks = _cdiv(HW, chunk)
        ragged = (HW % chunk) != 0

        bt_cap = max(1, tile_budget // (C * chunk * itemsize))
        Bt = min(N, bt_cap)
        if N >= 2:
            Bt = min(Bt, _cdiv(N, 2))
        num_nb = _cdiv(N, Bt)

        # Pass 1: per-(n, c) sum of squares, accumulated in f32 across chunks.
        # TODO(synk): for N == 1 on v7x, split the chunk axis into a leading
        # parallel axis of 2 partial sums so both TensorCores get pass-1 work.
        ss = pl.pallas_call(
            functools.partial(_grn_sumsq_kernel, hw_true=HW, chunk=chunk,
                              ragged=ragged),
            out_shape=jax.ShapeDtypeStruct((N, C, 1), jnp.float32),
            grid_spec=pltpu.PrefetchScalarGridSpec(
                num_scalar_prefetch=0,
                grid=(num_nb, num_chunks),
                in_specs=[
                    pl.BlockSpec((Bt, C, chunk), lambda i, j: (i, 0, j)),
                ],
                out_specs=pl.BlockSpec((Bt, C, 1), lambda i, j: (i, 0, 0)),
            ),
            compiler_params=pltpu.CompilerParams(
                dimension_semantics=("parallel", "arbitrary"),
                vmem_limit_bytes=vmem_limit,
            ),
        )(x3)

        # Pass 2: apply the fused per-channel scale per chunk (fully parallel).
        out3 = pl.pallas_call(
            functools.partial(_grn_apply_kernel, eps=eps, c_true=float(C)),
            out_shape=jax.ShapeDtypeStruct((N, C, HW), dtype),
            grid_spec=pltpu.PrefetchScalarGridSpec(
                num_scalar_prefetch=0,
                grid=(num_nb, num_chunks),
                in_specs=[
                    pl.BlockSpec((Bt, C, 1), lambda i, j: (i, 0, 0)),
                    pl.BlockSpec((1, C, 1), lambda i, j: (0, 0, 0)),
                    pl.BlockSpec((1, C, 1), lambda i, j: (0, 0, 0)),
                    pl.BlockSpec((Bt, C, chunk), lambda i, j: (i, 0, j)),
                ],
                out_specs=pl.BlockSpec((Bt, C, chunk), lambda i, j: (i, 0, j)),
            ),
            compiler_params=pltpu.CompilerParams(
                dimension_semantics=("parallel", "parallel"),
                vmem_limit_bytes=vmem_limit,
            ),
        )(ss, g3, b3, x3)

    return out3.reshape(N, C, H, W)


def grn_reference(x, gamma, beta, eps=1e-6):
    """Pure-JAX reference matching the PyTorch forward exactly."""
    gx = jnp.sqrt(jnp.sum(x.astype(jnp.float32) ** 2, axis=(2, 3), keepdims=True))
    nx = gx / (jnp.mean(gx, axis=1, keepdims=True) + eps)
    return (gamma * (x * nx) + beta + x).astype(x.dtype)


if __name__ == "__main__":
    key = jax.random.PRNGKey(0)
    kx, kg, kb, kx2, kx3, kx4 = jax.random.split(key, 6)

    # Small shapes consistent with the module: batch=2, channels=4, spatial=16x16
    N, C, H, W = 2, 4, 16, 16
    x = jax.random.normal(kx, (N, C, H, W), dtype=jnp.float32)
    # Deterministic parameter init mirroring torch.empty(...).normal_(std=0.02)
    gamma = 0.02 * jax.random.normal(kg, (1, C, 1, 1), dtype=jnp.float32)
    beta = 0.02 * jax.random.normal(kb, (1, C, 1, 1), dtype=jnp.float32)

    # Tolerance note: the per-channel denominator uses pl.reciprocal(approx=True)
    # (EUP path), so f32 checks use a slightly relaxed 2e-3 tolerance.
    TOL = dict(atol=2e-3, rtol=2e-3)

    # 1) Fused single-pass path (aligned HW; 2 grid steps so both v7x TCs work).
    out = jax.block_until_ready(grn_forward(x, gamma, beta))
    ref = grn_reference(x, gamma, beta)
    assert out.shape == (N, C, H, W)
    assert jnp.allclose(out, ref, **TOL), "fused path mismatch"

    # 2) Fused path on a non-128-aligned spatial size (no padding, full-dim HW block).
    x2 = jax.random.normal(kx2, (2, C, 14, 14), dtype=jnp.float32)
    out2 = jax.block_until_ready(grn_forward(x2, gamma, beta))
    assert jnp.allclose(out2, grn_reference(x2, gamma, beta), **TOL), \
        "fused unaligned-HW mismatch"

    # 3) Two-pass path forced via hw_chunk: ragged last chunk masked in pass 1.
    out3 = jax.block_until_ready(grn_forward(x2, gamma, beta, hw_chunk=128))
    assert jnp.allclose(out3, grn_reference(x2, gamma, beta), **TOL), \
        "chunked path mismatch"

    # 4) Strip-mined fused reduction (forced 128-lane sub-blocks, HW = 384).
    x4 = jax.random.normal(kx4, (2, C, 16, 24), dtype=jnp.float32)
    out4 = jax.block_until_ready(grn_forward(x4, gamma, beta, fused_sub=128))
    assert jnp.allclose(out4, grn_reference(x4, gamma, beta), **TOL), \
        "strip-mined fused path mismatch"

    # 5) bf16 with a ragged batch block (N=3, Bt=2): loose bf16-apply tolerance.
    xb = jax.random.normal(kx3, (3, C, H, W), dtype=jnp.bfloat16)
    gb, bb = gamma.astype(jnp.bfloat16), beta.astype(jnp.bfloat16)
    outb = jax.block_until_ready(grn_forward(xb, gb, bb))
    refb = grn_reference(xb, gb, bb)
    assert jnp.allclose(outb.astype(jnp.float32), refb.astype(jnp.float32),
                        atol=1e-1, rtol=1e-1), "bf16 path mismatch"

    print("KERNEL_OK")
</pallas_src>

<mosaic_0001>
module attributes {stable_mosaic.version = 11 : i64} {
  func.func @_grn_fused_kernel(%arg0: i32, %arg1: memref<1x4x1xf32, #tpu.memory_space<vmem>>, %arg2: memref<1x4x1xf32, #tpu.memory_space<vmem>>, %arg3: memref<1x4x256xf32, #tpu.memory_space<vmem>>, %arg4: memref<1x4x256xf32, #tpu.memory_space<vmem>>) attributes {dimension_semantics = [#tpu.dimension_semantics<parallel>], iteration_bounds = array<i64: 2>, scalar_prefetch = 0 : i64, scratch_operands = 0 : i64, tpu.core_type = #tpu.core_type<tc>, window_params = [{pipeline_mode = #tpu.pipeline_mode<synchronous>, transform_indices = @transform_0, window_bounds = array<i64: 1, 4, 1>}, {pipeline_mode = #tpu.pipeline_mode<synchronous>, transform_indices = @transform_1, window_bounds = array<i64: 1, 4, 1>}, {transform_indices = @transform_2, window_bounds = array<i64: 1, 4, 256>}, {transform_indices = @transform_3, window_bounds = array<i64: 1, 4, 256>}]} {
    %cst = arith.constant 0.000000e+00 : f32
    %0 = vector.broadcast %cst : f32 to vector<1x4x1xf32>
    %c0 = arith.constant 0 : index
    %c0_0 = arith.constant 0 : index
    %c0_1 = arith.constant 0 : index
    %1 = vector.load %arg3[%c0, %c0_0, %c0_1] : memref<1x4x256xf32, #tpu.memory_space<vmem>>, vector<1x4x256xf32>
    %2 = arith.mulf %1, %1 : vector<1x4x256xf32>
    %cst_2 = arith.constant dense<0.000000e+00> : vector<1x4xf32>
    %3 = vector.multi_reduction <add>, %2, %cst_2 [2] : vector<1x4x256xf32> to vector<1x4xf32>
    %4 = vector.shape_cast %3 : vector<1x4xf32> to vector<1x4x1xf32>
    %5 = arith.addf %0, %4 : vector<1x4x1xf32>
    %6 = math.sqrt %5 : vector<1x4x1xf32>
    %cst_3 = arith.constant dense<0.000000e+00> : vector<1x1xf32>
    %7 = vector.multi_reduction <add>, %6, %cst_3 [1] : vector<1x4x1xf32> to vector<1x1xf32>
    %8 = vector.shape_cast %7 : vector<1x1xf32> to vector<1x1x1xf32>
    %cst_4 = arith.constant 2.500000e-01 : f32
    %9 = vector.broadcast %cst_4 : f32 to vector<1x1x1xf32>
    %10 = arith.mulf %8, %9 : vector<1x1x1xf32>
    %cst_5 = arith.constant 9.99999997E-7 : f32
    %11 = vector.broadcast %cst_5 : f32 to vector<1x1x1xf32>
    %12 = arith.addf %10, %11 : vector<1x1x1xf32>
    %13 = tpu.reciprocal %12 {approx = true} : vector<1x1x1xf32> -> vector<1x1x1xf32>
    %14 = vector.broadcast %13 : vector<1x1x1xf32> to vector<1x4x1xf32>
    %15 = arith.mulf %6, %14 : vector<1x4x1xf32>
    %c0_6 = arith.constant 0 : index
    %c0_7 = arith.constant 0 : index
    %c0_8 = arith.constant 0 : index
    %16 = vector.load %arg1[%c0_6, %c0_7, %c0_8] : memref<1x4x1xf32, #tpu.memory_space<vmem>>, vector<1x4x1xf32>
    %17 = arith.mulf %16, %15 : vector<1x4x1xf32>
    %cst_9 = arith.constant 1.000000e+00 : f32
    %18 = vector.broadcast %cst_9 : f32 to vector<1x4x1xf32>
    %19 = arith.addf %17, %18 : vector<1x4x1xf32>
    %c0_10 = arith.constant 0 : index
    %c0_11 = arith.constant 0 : index
    %c0_12 = arith.constant 0 : index
    %20 = vector.load %arg3[%c0_10, %c0_11, %c0_12] : memref<1x4x256xf32, #tpu.memory_space<vmem>>, vector<1x4x256xf32>
    %21 = vector.broadcast %19 : vector<1x4x1xf32> to vector<1x4x256xf32>
    %22 = arith.mulf %20, %21 : vector<1x4x256xf32>
    %c0_13 = arith.constant 0 : index
    %c0_14 = arith.constant 0 : index
    %c0_15 = arith.constant 0 : index
    %23 = vector.load %arg2[%c0_13, %c0_14, %c0_15] : memref<1x4x1xf32, #tpu.memory_space<vmem>>, vector<1x4x1xf32>
    %24 = vector.broadcast %23 : vector<1x4x1xf32> to vector<1x4x256xf32>
    %25 = arith.addf %22, %24 : vector<1x4x256xf32>
    %c0_16 = arith.constant 0 : index
    %c0_17 = arith.constant 0 : index
    %c0_18 = arith.constant 0 : index
    %26 = vector.load %arg4[%c0_16, %c0_17, %c0_18] : memref<1x4x256xf32, #tpu.memory_space<vmem>>, vector<1x4x256xf32>
    tpu.vector_store %arg4[%c0_16, %c0_17, %c0_18], %25 {strides = array<i32>} : memref<1x4x256xf32, #tpu.memory_space<vmem>>, vector<1x4x256xf32>,
    return
  }
  func.func @transform_0(%arg0: i32) -> (i32, i32, i32) {
    %c0_i32 = arith.constant 0 : i32
    %c0_i32_0 = arith.constant 0 : i32
    %c0_i32_1 = arith.constant 0 : i32
    %c0_i32_2 = arith.constant 0 : i32
    return %c0_i32, %c0_i32_0, %c0_i32_1 : i32, i32, i32
  }
  func.func @transform_1(%arg0: i32) -> (i32, i32, i32) {
    %c0_i32 = arith.constant 0 : i32
    %c0_i32_0 = arith.constant 0 : i32
    %c0_i32_1 = arith.constant 0 : i32
    %c0_i32_2 = arith.constant 0 : i32
    return %c0_i32, %c0_i32_0, %c0_i32_1 : i32, i32, i32
  }
  func.func @transform_2(%arg0: i32) -> (i32, i32, i32) {
    %c0_i32 = arith.constant 0 : i32
    %c0_i32_0 = arith.constant 0 : i32
    %c0_i32_1 = arith.constant 0 : i32
    return %arg0, %c0_i32, %c0_i32_0 : i32, i32, i32
  }
  func.func @transform_3(%arg0: i32) -> (i32, i32, i32) {
    %c0_i32 = arith.constant 0 : i32
    %c0_i32_0 = arith.constant 0 : i32
    %c0_i32_1 = arith.constant 0 : i32
    return %arg0, %c0_i32, %c0_i32_0 : i32, i32, i32
  }
}

</mosaic_0001>

<llo_original>
// kernel: tpu_custom_call.1
$region0: #{tpu_custom_call.1}
  #allocation0 [shape = 'u32[]', space=smem, size = 0x4, offset = 0x4, fixed_abs, tag = 'smem constant byte address 0x4 - core index']
  #allocation1 [shape = 'u32[144,128]{1,0:T(1,128)}', space=vmem, size = 0x12000, scoped, tag = 'internal scratch']
  %s0 = inlined_call_operand.vmem [shape: f32[1,4,1], index: 0, kind: input, shape index: {}]
  %s1 = inlined_call_operand.vmem [shape: f32[1,4,1], index: 1, kind: input, shape index: {}]
  %s2 = inlined_call_operand.vmem [shape: f32[2,4,256], index: 2, kind: input, shape index: {}]
  %s3 = inlined_call_operand.hbm [shape: f32[2,4,256], index: 3, kind: output, shape index: {}]
  %s4 = sld [smem:[#allocation0]]
  $region45: #{tpu_custom_call.1} parent=0
    _
  %s6 = ssub.s32 1, %s4
  %s7 = scalar_select 0, %s6, %s4
  $region1: #{tpu_custom_call.1} parent=0
    #allocation2 [shape = 'u8[8192]{0}', space=vmem, size = 0x2000, scoped, tag = 'output window, operand 0']
    #allocation3 [shape = 's32[2]{0}', space=sflag, size = 0x8, scoped, tag = 'scoped memory for tpu_custom_call.1']
    %8 = vsyncpa [#allocation3], 0
    %s9 = scalar_lea.sflag [#allocation3], 1
    %10 = vsyncpa %s9, 0
    loop: start=0, step=1, limit=4
    $region2: #{tpu_custom_call.1} parent=1 // loop_pre_header
      _
    $region3: #{tpu_custom_call.1} parent=1 // loop_header
      %s12 = sphi 0, %s16
      %p13 = scmp.ge.s32.totalorder %s12, 4
      %s20 = sphi 0, %s20
      %s22 = sphi 0, %s20
      %s23 = sphi 0, %s22
      %s37 = sphi 0, %s23
      %s41 = sphi 0, %s41
      %s43 = sphi 0, %s41
      %s44 = sphi 0, %s43
      %s58 = sphi 0, %s44
      %s64 = sphi 0, %s66
      %s67 = sphi 0, %s64
      %s68 = sphi 0, %s67
      %s84 = sphi 0, %s68
      %s90 = sphi 0, %s92
      %s93 = sphi 0, %s90
      %s94 = sphi 0, %s93
      %s110 = sphi 0, %s94
    $region4: #{tpu_custom_call.1} parent=1 // loop_header_branch
      %15 = sbr.rel (%p13) target = $region8
    $region5: #{tpu_custom_call.1} parent=1 // loop_body
      %s17 = ssub.s32 %s12, 1
      %s18 = ssub.s32 %s12, 2
      %s19 = sadd.s32 %s12, 1
      %s21 = sadd.s32 %s20, 1
      %p24 = scmp.eq.s32.totalorder %s12, 1
      %p25 = scmp.ne.s32.totalorder %s20, %s22
      %p26 = scmp.eq.s32.totalorder %s12, 0
      %p27 = por %p25, %p26
      %p28 = scmp.ne.s32.totalorder %s20, %s22
      %p29 = scmp.eq.s32.totalorder %s17, 1
      %p30 = por %p28, %p29
      %p31 = scmp.ne.s32.totalorder %s22, %s23
      %p32 = scmp.eq.s32.totalorder %s17, 0
      %p33 = por %p31, %p32
      %p34 = scmp.ne.s32.totalorder %s22, %s23
      %p35 = scmp.eq.s32.totalorder %s18, 1
      %p36 = por %p34, %p35
      %p38 = scmp.ne.s32.totalorder %s23, %s37
      %p39 = scmp.eq.s32.totalorder %s18, 0
      %p40 = por %p38, %p39
      %s42 = sadd.s32 %s41, 1
      %p45 = scmp.eq.s32.totalorder %s12, 1
      %p46 = scmp.ne.s32.totalorder %s41, %s43
      %p47 = scmp.eq.s32.totalorder %s12, 0
      %p48 = por %p46, %p47
      %p49 = scmp.ne.s32.totalorder %s41, %s43
      %p50 = scmp.eq.s32.totalorder %s17, 1
      %p51 = por %p49, %p50
      %p52 = scmp.ne.s32.totalorder %s43, %s44
      %p53 = scmp.eq.s32.totalorder %s17, 0
      %p54 = por %p52, %p53
      %p55 = scmp.ne.s32.totalorder %s43, %s44
      %p56 = scmp.eq.s32.totalorder %s18, 1
      %p57 = por %p55, %p56
      %p59 = scmp.ne.s32.totalorder %s44, %s58
      %p60 = scmp.eq.s32.totalorder %s18, 0
      %p61 = por %p59, %p60
      %s62 = ssub.s32 %s12, %s19
      %p63 = scmp.eq.s32.totalorder %s62, 0
      %s65 = sadd.s32 %s64, 1
      %s66 = scalar_select %p63, %s64, %s65
      %p69 = pneg %p63
      %p70 = scmp.eq.s32.totalorder %s12, 1
      %p71 = por %p69, %p70
      %p72 = scmp.ne.s32.totalorder %s64, %s67
      %p73 = scmp.eq.s32.totalorder %s12, 0
      %p74 = por %p72, %p73
      %p75 = scmp.ne.s32.totalorder %s64, %s67
      %p76 = scmp.eq.s32.totalorder %s17, 1
      %p77 = por %p75, %p76
      %p78 = scmp.ne.s32.totalorder %s67, %s68
      %p79 = scmp.eq.s32.totalorder %s17, 0
      %p80 = por %p78, %p79
      %p81 = scmp.ne.s32.totalorder %s67, %s68
      %p82 = scmp.eq.s32.totalorder %s18, 1
      %p83 = por %p81, %p82
      %p85 = scmp.ne.s32.totalorder %s68, %s84
      %p86 = scmp.eq.s32.totalorder %s18, 0
      %p87 = por %p85, %p86
      %s88 = ssub.s32 %s12, %s19
      %p89 = scmp.eq.s32.totalorder %s88, 0
      %s91 = sadd.s32 %s90, 1
      %s92 = scalar_select %p89, %s90, %s91
      %p95 = pneg %p89
      %p96 = scmp.eq.s32.totalorder %s12, 1
      %p97 = por %p95, %p96
      %p98 = scmp.ne.s32.totalorder %s90, %s93
      %p99 = scmp.eq.s32.totalorder %s12, 0
      %p100 = por %p98, %p99
      %p101 = scmp.ne.s32.totalorder %s90, %s93
      %p102 = scmp.eq.s32.totalorder %s17, 1
      %p103 = por %p101, %p102
      %p104 = scmp.ne.s32.totalorder %s93, %s94
      %p105 = scmp.eq.s32.totalorder %s17, 0
      %p106 = por %p104, %p105
      %p107 = scmp.ne.s32.totalorder %s93, %s94
      %p108 = scmp.eq.s32.totalorder %s18, 1
      %p109 = por %p107, %p108
      %p111 = scmp.ne.s32.totalorder %s94, %s110
      %p112 = scmp.eq.s32.totalorder %s18, 0
      %p113 = por %p111, %p112
      %p114 = scmp.le.s32.totalorder 1, %s12
      %p115 = scmp.lt.s32.totalorder %s12, 3
      %p116 = pnand %p114, %p115
      %p117 = pneg %p116
      // Predicated region
      $region9: #{tpu_custom_call.1} parent=5 // pred_check
        _
      $region10: #{tpu_custom_call.1} parent=5 // pred_check_branch
        %119 = sbr.rel (%p116) target = $region12
      $region11: #{tpu_custom_call.1} parent=5 // pred_region
        %s120 = ssub.s32 %s12, 1
        // Predicated region
        $region13: #{tpu_custom_call.1} parent=11 // pred_check
          %p121 = pneg %p33
        $region14: #{tpu_custom_call.1} parent=11 // pred_check_branch
          %123 = sbr.rel (%p121) target = $region16
        $region15: #{tpu_custom_call.1} parent=11 // pred_region
          _
        $region16: #{tpu_custom_call.1} parent=11 // pred_fallthru
          _
        // Predicated region
        $region17: #{tpu_custom_call.1} parent=11 // pred_check
          %p124 = pneg %p54
        $region18: #{tpu_custom_call.1} parent=11 // pred_check_branch
          %126 = sbr.rel (%p124) target = $region20
        $region19: #{tpu_custom_call.1} parent=11 // pred_region
          _
        $region20: #{tpu_custom_call.1} parent=11 // pred_fallthru
          _
      $region12: #{tpu_custom_call.1} parent=5 // pred_fallthru
        _
      %p127 = scmp.lt.s32.totalorder %s12, 2
      // Predicated region
      $region21: #{tpu_custom_call.1} parent=5 // pred_check
        %p128 = pneg %p127
      $region22: #{tpu_custom_call.1} parent=5 // pred_check_branch
        %130 = sbr.rel (%p128) target = $region24
      $region23: #{tpu_custom_call.1} parent=5 // pred_region
        // Predicated region
        $region25: #{tpu_custom_call.1} parent=23 // pred_check
          %p131 = pneg %p74
        $region26: #{tpu_custom_call.1} parent=23 // pred_check_branch
          %133 = sbr.rel (%p131) target = $region28
        $region27: #{tpu_custom_call.1} parent=23 // pred_region
          %p134 = scmp.lt.s32.totalorder %s12, 1
          %s135 = scalar_select %p134, %s12, 1
          %s136 = smul.addr %s135, 2
          %s137 = smul.addr %s136, 4
          %s138 = scalar_lea.vmem %s2, %s137
        $region28: #{tpu_custom_call.1} parent=23 // pred_fallthru
          _
      $region24: #{tpu_custom_call.1} parent=5 // pred_fallthru
        _
      %p139 = scmp.le.s32.totalorder 1, %s12
      %p140 = scmp.lt.s32.totalorder %s12, 3
      %p141 = pnand %p139, %p140
      %p142 = pneg %p141
      // Predicated region
      $region29: #{tpu_custom_call.1} parent=5 // pred_check
        _
      $region30: #{tpu_custom_call.1} parent=5 // pred_check_branch
        %144 = sbr.rel (%p141) target = $region32
      $region31: #{tpu_custom_call.1} parent=5 // pred_region
        %s145 = ssub.s32 %s12, 1
        %p146 = pneg %p33
        %p147 = pneg %p30
        %p148 = pneg %p54
        %p149 = pneg %p51
        %p150 = scmp.lt.s32.totalorder %s17, 1
        %s151 = scalar_select %p150, %s17, 1
        %s152 = smul.addr %s151, 2
        %s153 = smul.addr %s152, 4
        %s154 = scalar_lea.vmem %s2, %s153
        %p155 = pneg %p80
        %p156 = pneg %p77
        %p157 = pneg %p106
        %p158 = pneg %p103
        %s159 = sand.u32 %s93, 1
        %s160 = scalar_lea.sflag [#allocation3], %s159
        %s161 = sand.u32 %s93, 1
        %s162 = smul.addr %s161, 8
        %s163 = scalar_lea.vmem [#allocation2], %s162
        %p164 = scmp.lt.s32.totalorder %s17, 1
        %s165 = scalar_select %p164, %s17, 1
        %s166 = smul.addr %s165, 2
        %s167 = smul.addr %s166, 4
        %s168 = scalar_lea.vmem %s2, %s167
        %v169 = vld [vmem:[%s168] sm:$0xff]
        %v170 = vmul.f32 %v169, %v169
        %v172 = vcombine.high %v170, %v170
        %vm174 = vcmask 1043456
        %v175 = vsel %vm174, %v170, 0.0
        %v176 = vsel %vm174, %v172, 0.0
        %v177 = vadd.f32 %v175, %v176
        %178 = vadd.xlane.f32.xlu0 %v177
        %v179 = vpop.xlane.xlu0 %178
        %v180 = vadd.f32 %v179, 0.0
        %v181 = vrsqrt.pop %v180
        %v182 = vmul.f32 %v180, %v181
        %vm183 = vcmp.eq.f32.partialorder %v180, inf
        %v184 = vsel %vm183, %v180, %v182
        %vm185 = vcmp.eq.f32.partialorder %v180, 0.0
        %v186 = vand.u32 %v180, 2147483648
        %v187 = vsel %vm185, %v186, %v184
        %v188 = vsel %vm174, %v187, 0.0
        %v189 = vrot.slane %v188, 4
        %v190 = vadd.f32 %v188, %v189
        %v191 = vrot.slane %v190, 2
        %v192 = vadd.f32 %v190, %v191
        %v193 = vrot.slane %v192, 1
        %v194 = vadd.f32 %v192, %v193
        %v195 = vmul.f32 %v194, 0.25
        %v196 = vadd.f32 %v195, 1e-06
        %v197 = vrcp.pop %v196
        %v198 = vmul.f32 %v187, %v197
        %v199 = vld [vmem:[%s0] sm:$0xf]
        %v200 = vmul.f32 %v199, %v198
        %v201 = vadd.f32 %v200, 1.0
        %203 = vset.pattern.permute.xlu0 0
        %204 = vperm.xlu0 %203, %v201
        %v205 = vpop.permute.xlu0 %204
        %v207 = vunpack.c.l.s4 839922192
        %v208 = vunpack.c.0.s8 %v207
        %v209 = vlaneseq
        %v210 = vshrl.u32 %v209, 7
        %v211 = vsub.s32 %v208, %v210
        %v212 = vrot.slane %v205, %v211
        %v214 = vmul.f32 %v169, %v212
        %v215 = vld [vmem:[%s1] sm:$0xf]
        %217 = vset.pattern.permute.xlu0 0
        %218 = vperm.xlu0 %217, %v215
        %v219 = vpop.permute.xlu0 %218
        %v221 = vunpack.c.l.s4 839922192
        %v222 = vunpack.c.0.s8 %v221
        %v223 = vlaneseq
        %v224 = vshrl.u32 %v223, 7
        %v225 = vsub.s32 %v222, %v224
        %v226 = vrot.slane %v219, %v225
        %v228 = vadd.f32 %v214, %v226
        %229 = vst [vmem:[%s163] sm:$0xff] %v228
        %s230 = sand.u32 %s93, 1
        %s231 = scalar_lea.sflag [#allocation3], %s230
        %s232 = sand.u32 %s93, 1
        %s233 = smul.addr %s232, 8
        %s234 = scalar_lea.vmem [#allocation2], %s233
        // Predicated region
        $region33: #{tpu_custom_call.1} parent=31 // pred_check
          %p235 = pneg %p103
        $region34: #{tpu_custom_call.1} parent=31 // pred_check_branch
          %237 = sbr.rel (%p235) target = $region36
        $region35: #{tpu_custom_call.1} parent=31 // pred_region
          %s239 = ssub.s32 128, 128
          %240 = vsyncadd %s231, %s239
          %s241 = smul.addr %s17, 2
          %s242 = smul.addr %s241, 64
          %s243 = scalar_lea.hbm %s3, %s242
          %s245 = sshll.u32 %s234, 4
          %s246 = int_to_ptr.vmem [resolvable:$true] %s245
          %248 = dma.vmem_to_hbm [thread:$0]  %s246, 128, %s243, %s231
        $region36: #{tpu_custom_call.1} parent=31 // pred_fallthru
          _
      $region32: #{tpu_custom_call.1} parent=5 // pred_fallthru
        _
      %p249 = scmp.le.s32.totalorder 2, %s12
      // Predicated region
      $region37: #{tpu_custom_call.1} parent=5 // pred_check
        %p250 = pneg %p249
      $region38: #{tpu_custom_call.1} parent=5 // pred_check_branch
        %252 = sbr.rel (%p250) target = $region40
      $region39: #{tpu_custom_call.1} parent=5 // pred_region
        %s253 = ssub.s32 %s12, 2
        // Predicated region
        $region41: #{tpu_custom_call.1} parent=39 // pred_check
          %p254 = pneg %p109
        $region42: #{tpu_custom_call.1} parent=39 // pred_check_branch
          %256 = sbr.rel (%p254) target = $region44
        $region43: #{tpu_custom_call.1} parent=39 // pred_region
          %s257 = sand.u32 %s94, 1
          %s258 = scalar_lea.sflag [#allocation3], %s257
          %s259 = sand.u32 %s94, 1
          %s260 = smul.addr %s259, 8
          %s261 = scalar_lea.vmem [#allocation2], %s260
          %262 = dma.done %s258, 128
        $region44: #{tpu_custom_call.1} parent=39 // pred_fallthru
          _
      $region40: #{tpu_custom_call.1} parent=5 // pred_fallthru
        _
    $region6: #{tpu_custom_call.1} parent=1 // loop_footer
      %s16 = sadd.s32 1, %s12
    $region7: #{tpu_custom_call.1} parent=1 // loop_footer_branch
      %11 = sbr.rel target = $region3
    $region8: #{tpu_custom_call.1} parent=1 // loop_exit
      _
    %263 = vsyncpa [#allocation3], 1
    %s264 = scalar_lea.sflag [#allocation3], 1
    %265 = vsyncpa %s264, 1

</llo_original>
